<compile_context>
chip_gen: v7x
topology: tpu7x:2x2x1
jax: 0.10.0
libtpu: 0.0.40
codegen_flags: <defaults>
</compile_context>

<pallas_src>
import functools
import math

import jax
import jax.numpy as jnp
from jax.experimental import pallas as pl
from jax.experimental.pallas import tpu as pltpu

LN_EPS = 1e-5                      # torch.nn.LayerNorm default
NEG_INF = -1e30


def _device_defaults():
    """(vmem_limit_bytes, token_tile_target) tuned per TPU generation."""
    try:
        kind = jax.devices()[0].device_kind.lower()
    except Exception:
        kind = ""
    if any(t in kind for t in ("v4", "v5", "v6")):
        # 128 MiB physical VMEM: large token tiles cut weight re-streaming.
        return 100 * 1024 * 1024, 1024
    # v7x (64 MiB physical VMEM) or unknown: conservative.
    return 48 * 1024 * 1024, 512


VMEM_LIMIT, TM_TARGET = _device_defaults()
TN_TARGET = 512      # dense output-feature tile
TI_TARGET = 512      # MLP intermediate tile
TQ_TARGET = 512      # attention query tile (per head-group)
HEAD_GROUP = 8       # heads processed per attention grid step


# -----------------------------------------------------------------------------
# Small helpers
# -----------------------------------------------------------------------------
def _tile(dim, target):
    """Feature-dim tile: `target` if it divides `dim`, else the full dim."""
    if dim <= target:
        return dim
    return target if dim % target == 0 else dim


def _row_tile(dim, target):
    """Token-dim tile: full dim when small, else `target` (callers pad)."""
    return dim if dim <= target else target


def _pad_rows(x, mult):
    pad = (-x.shape[0]) % mult
    if pad == 0:
        return x
    return jnp.pad(x, ((0, pad),) + ((0, 0),) * (x.ndim - 1))


def _pad_axis(x, axis, mult):
    pad = (-x.shape[axis]) % mult
    if pad == 0:
        return x
    widths = [(0, 0)] * x.ndim
    widths[axis] = (0, pad)
    return jnp.pad(x, widths)


def _layernorm_f32(x, gamma):
    mu = jnp.mean(x, axis=-1, keepdims=True)
    xc = x - mu
    var = jnp.mean(xc * xc, axis=-1, keepdims=True)
    return xc * jax.lax.rsqrt(var + LN_EPS) * gamma


def _erf(x):
    # Abramowitz & Stegun 7.1.26 (|err| <= 1.5e-7): exact-erf-GELU semantics
    # to f32 noise, guaranteed VPU/EUP lowering (exp + mul only).
    a1, a2, a3, a4, a5 = (0.254829592, -0.284496736, 1.421413741,
                          -1.453152027, 1.061405429)
    p = 0.3275911
    s = jnp.sign(x)
    z = jnp.abs(x)
    t = 1.0 / (1.0 + p * z)
    poly = ((((a5 * t + a4) * t + a3) * t + a2) * t + a1) * t
    return s * (1.0 - poly * jnp.exp(-z * z))


def _gelu_exact(x):
    return 0.5 * x * (1.0 + _erf(x * 0.7071067811865476))


# -----------------------------------------------------------------------------
# Fused (LayerNorm?) -> matmul -> (clip?) -> (+residual?) kernel
# -----------------------------------------------------------------------------
def _dense_kernel(*refs, clip, have_gamma, have_res):
    it = iter(refs)
    x_ref = next(it)
    g_ref = next(it) if have_gamma else None
    w_ref = next(it)
    res_ref = next(it) if have_res else None
    o_ref = next(it)

    x = x_ref[...]
    if have_gamma:
        # LN recomputed per N-tile: pure VPU work, hidden under the MXU matmul.
        x = _layernorm_f32(x.astype(jnp.float32), g_ref[...]).astype(jnp.bfloat16)
    y = jnp.dot(x, w_ref[...], preferred_element_type=jnp.float32)
    if clip is not None:
        y = jnp.clip(y, -clip, clip)        # qkv.clamp_(min=-clip_qkv, max=clip_qkv)
    if have_res:
        y = y + res_ref[...].astype(jnp.float32)
    o_ref[...] = y.astype(o_ref.dtype)


def dense(x, w, *, gamma=None, residual=None, clip=None,
          out_dtype=jnp.bfloat16, tm_target=None, tn_target=TN_TARGET):
    if tm_target is None:
        tm_target = TM_TARGET
    T0, K = x.shape
    N = w.shape[1]
    tm = _row_tile(T0, tm_target)
    tn = _tile(N, tn_target)

    xp = _pad_rows(x, tm)
    T = xp.shape[0]

    in_specs = [pl.BlockSpec((tm, K), lambda i, j: (i, 0))]
    args = [xp]
    if gamma is not None:
        in_specs.append(pl.BlockSpec((1, K), lambda i, j: (0, 0)))
        args.append(gamma.reshape(1, K).astype(jnp.float32))
    in_specs.append(pl.BlockSpec((K, tn), lambda i, j: (0, j)))
    args.append(w)
    if residual is not None:
        in_specs.append(pl.BlockSpec((tm, tn), lambda i, j: (i, j)))
        args.append(_pad_rows(residual, tm))

    kernel = functools.partial(_dense_kernel, clip=clip,
                               have_gamma=gamma is not None,
                               have_res=residual is not None)
    out = pl.pallas_call(
        kernel,
        out_shape=jax.ShapeDtypeStruct((T, N), out_dtype),
        grid=(T // tm, N // tn),
        in_specs=in_specs,
        out_specs=pl.BlockSpec((tm, tn), lambda i, j: (i, j)),
        compiler_params=pltpu.CompilerParams(
            dimension_semantics=("parallel", "parallel"),
            vmem_limit_bytes=VMEM_LIMIT),
    )(*args)
    return out if T == T0 else out[:T0]


# -----------------------------------------------------------------------------
# Fused MLP block: LN2 -> up_proj -> GELU(erf) -> down_proj -> +residual
# Reduction over the intermediate dim I lives on an "arbitrary" grid axis.
# -----------------------------------------------------------------------------
def _mlp_kernel(x_ref, g_ref, wu_ref, wd_ref, o_ref, ln_ref, acc_ref):
    i = pl.program_id(1)

    @pl.when(i == 0)
    def _init():
        ln_ref[...] = _layernorm_f32(x_ref[...].astype(jnp.float32),
                                     g_ref[...]).astype(jnp.bfloat16)
        acc_ref[...] = jnp.zeros_like(acc_ref)

    h = jnp.dot(ln_ref[...], wu_ref[...], preferred_element_type=jnp.float32)
    h = _gelu_exact(h)                       # matches torch.nn.GELU() (exact erf)
    acc_ref[...] += jnp.dot(h.astype(jnp.bfloat16), wd_ref[...],
                            preferred_element_type=jnp.float32)

    @pl.when(i == pl.num_programs(1) - 1)
    def _finalize():
        o_ref[...] = (x_ref[...].astype(jnp.float32)
                      + acc_ref[...]).astype(o_ref.dtype)


def mlp_block(x, gamma, w_up, w_down, *, tm_target=None, ti_target=TI_TARGET):
    if tm_target is None:
        tm_target = TM_TARGET
    T0, D = x.shape
    I = w_up.shape[1]
    tm = _row_tile(T0, tm_target)
    ti = _tile(I, ti_target)
    xp = _pad_rows(x, tm)
    T = xp.shape[0]
    out = pl.pallas_call(
        _mlp_kernel,
        out_shape=jax.ShapeDtypeStruct((T, D), x.dtype),
        grid=(T // tm, I // ti),
        in_specs=[pl.BlockSpec((tm, D), lambda m, i: (m, 0)),
                  pl.BlockSpec((1, D), lambda m, i: (0, 0)),
                  pl.BlockSpec((D, ti), lambda m, i: (0, i)),
                  pl.BlockSpec((ti, D), lambda m, i: (i, 0))],
        out_specs=pl.BlockSpec((tm, D), lambda m, i: (m, 0)),
        scratch_shapes=[pltpu.VMEM((tm, D), jnp.bfloat16),   # cached LN(x)
                        pltpu.VMEM((tm, D), jnp.float32)],   # f32 accumulator
        compiler_params=pltpu.CompilerParams(
            dimension_semantics=("parallel", "arbitrary"),
            vmem_limit_bytes=VMEM_LIMIT),
    )(xp, gamma.reshape(1, D).astype(jnp.float32), w_up, w_down)
    return out if T == T0 else out[:T0]


# -----------------------------------------------------------------------------
# q_ln / k_ln (LayerNorm over d_model) fused into one call, tiled over tokens
# -----------------------------------------------------------------------------
def _qk_ln_kernel(q_ref, k_ref, qg_ref, kg_ref, qo_ref, ko_ref):
    qo_ref[...] = _layernorm_f32(q_ref[...].astype(jnp.float32),
                                 qg_ref[...]).astype(qo_ref.dtype)
    ko_ref[...] = _layernorm_f32(k_ref[...].astype(jnp.float32),
                                 kg_ref[...]).astype(ko_ref.dtype)


def qk_layer_norm(q, k, qg, kg, *, tm_target=None):
    if tm_target is None:
        tm_target = TM_TARGET
    T0, D = q.shape
    tm = _row_tile(T0, tm_target)
    qp = _pad_rows(q, tm)
    kp = _pad_rows(k, tm)
    T = qp.shape[0]
    spec_x = pl.BlockSpec((tm, D), lambda i: (i, 0))
    spec_g = pl.BlockSpec((1, D), lambda i: (0, 0))
    qo, ko = pl.pallas_call(
        _qk_ln_kernel,
        out_shape=(jax.ShapeDtypeStruct((T, D), q.dtype),
                   jax.ShapeDtypeStruct((T, D), k.dtype)),
        grid=(T // tm,),
        in_specs=[spec_x, spec_x, spec_g, spec_g],
        out_specs=(spec_x, spec_x),
        compiler_params=pltpu.CompilerParams(
            dimension_semantics=("parallel",),
            vmem_limit_bytes=VMEM_LIMIT),
    )(qp, kp, qg.reshape(1, D).astype(jnp.float32),
      kg.reshape(1, D).astype(jnp.float32))
    if T != T0:
        qo, ko = qo[:T0], ko[:T0]
    return qo, ko


# -----------------------------------------------------------------------------
# Final LayerNorm (norm_f)
# -----------------------------------------------------------------------------
def _ln_kernel(x_ref, g_ref, o_ref):
    o_ref[...] = _layernorm_f32(x_ref[...].astype(jnp.float32),
                                g_ref[...]).astype(o_ref.dtype)


def layer_norm(x, gamma, *, out_dtype=None, tm_target=None):
    if tm_target is None:
        tm_target = TM_TARGET
    if out_dtype is None:
        out_dtype = x.dtype
    T0, D = x.shape
    tm = _row_tile(T0, tm_target)
    xp = _pad_rows(x, tm)
    T = xp.shape[0]
    out = pl.pallas_call(
        _ln_kernel,
        out_shape=jax.ShapeDtypeStruct((T, D), out_dtype),
        grid=(T // tm,),
        in_specs=[pl.BlockSpec((tm, D), lambda i: (i, 0)),
                  pl.BlockSpec((1, D), lambda i: (0, 0))],
        out_specs=pl.BlockSpec((tm, D), lambda i: (i, 0)),
        compiler_params=pltpu.CompilerParams(
            dimension_semantics=("parallel",),
            vmem_limit_bytes=VMEM_LIMIT),
    )(xp, gamma.reshape(1, D).astype(jnp.float32))
    return out if T == T0 else out[:T0]


# -----------------------------------------------------------------------------
# Flash-style causal attention with ALiBi.  Head-major (B, H, S, hd) layout and
# a head-group grid axis so every MXU feed is a clean leading-batch matmul.
# The KV index_map is clamped to the causal limit so above-diagonal K/V tiles
# are neither DMA'd nor computed.
# -----------------------------------------------------------------------------
def _flash_attn_kernel(slope_ref, q_ref, k_ref, v_ref, o_ref,
                       m_ref, l_ref, acc_ref, *, scale, tq, tkv):
    qi = pl.program_id(2)
    ki = pl.program_id(3)

    @pl.when(ki == 0)
    def _init():
        m_ref[...] = jnp.full_like(m_ref, NEG_INF)
        l_ref[...] = jnp.zeros_like(l_ref)
        acc_ref[...] = jnp.zeros_like(acc_ref)

    q_start = qi * tq
    k_start = ki * tkv

    # Skip kv tiles entirely above the causal diagonal.
    @pl.when(k_start <= q_start + tq - 1)
    def _compute():
        q = q_ref[...]                       # (hg, tq, hd) bf16
        k = k_ref[...]                       # (hg, tkv, hd)
        v = v_ref[...]
        s = jnp.einsum("hqd,hkd->hqk", q, k,
                       preferred_element_type=jnp.float32) * scale
        i_idx = q_start + jax.lax.broadcasted_iota(jnp.int32, (tq, tkv), 0)
        j_idx = k_start + jax.lax.broadcasted_iota(jnp.int32, (tq, tkv), 1)
        # ALiBi: bias[h, i, j] = slope[h] * (j - i)
        s = s + slope_ref[...] * (j_idx - i_idx).astype(jnp.float32)
        s = jnp.where(j_idx <= i_idx, s, NEG_INF)          # causal mask

        m_prev = m_ref[...]                                 # (hg, tq, 1)
        m_new = jnp.maximum(m_prev, jnp.max(s, axis=-1, keepdims=True))
        alpha = jnp.exp(m_prev - m_new)
        p = jnp.exp(s - m_new)
        l_ref[...] = alpha * l_ref[...] + jnp.sum(p, axis=-1, keepdims=True)
        acc_ref[...] = alpha * acc_ref[...] + jnp.einsum(
            "hqk,hkd->hqd", p.astype(v.dtype), v,
            preferred_element_type=jnp.float32)
        m_ref[...] = m_new

    @pl.when(ki == pl.num_programs(3) - 1)
    def _finalize():
        # Exact divide (not approx reciprocal) for parity with the reference.
        o_ref[...] = (acc_ref[...] / l_ref[...]).astype(o_ref.dtype)


def flash_attention(q, k, v, slopes, scale, *,
                    tq_target=TQ_TARGET, head_group=HEAD_GROUP):
    B, H, S0, hd = q.shape
    hg = min(H, head_group)
    while H % hg:
        hg -= 1
    t = tq_target if S0 > tq_target else S0          # one tile size for q & kv
    tq = tkv = t
    q = _pad_axis(q, 2, t)
    k = _pad_axis(k, 2, t)
    v = _pad_axis(v, 2, t)
    S = q.shape[2]

    def q_index(b, g, qi, ki):
        return (b, g, qi, 0)

    def kv_index(b, g, qi, ki):
        # Clamp to the causal limit so above-diagonal tiles re-use the previous
        # block index and Pallas skips the DMA entirely.
        kmax = (qi * tq + tq - 1) // tkv
        return (b, g, jnp.minimum(ki, kmax), 0)

    kernel = functools.partial(_flash_attn_kernel, scale=scale, tq=tq, tkv=tkv)
    q_spec = pl.BlockSpec((None, hg, tq, hd), q_index)
    kv_spec = pl.BlockSpec((None, hg, tkv, hd), kv_index)
    slope_spec = pl.BlockSpec((hg, 1, 1), lambda b, g, qi, ki: (g, 0, 0))

    out = pl.pallas_call(
        kernel,
        out_shape=jax.ShapeDtypeStruct((B, H, S, hd), q.dtype),
        grid=(B, H // hg, S // tq, S // tkv),
        in_specs=[slope_spec, q_spec, kv_spec, kv_spec],
        out_specs=q_spec,
        scratch_shapes=[pltpu.VMEM((hg, tq, 1), jnp.float32),    # running max
                        pltpu.VMEM((hg, tq, 1), jnp.float32),    # running sum
                        pltpu.VMEM((hg, tq, hd), jnp.float32)],  # output acc
        compiler_params=pltpu.CompilerParams(
            dimension_semantics=("parallel", "parallel", "parallel", "arbitrary"),
            vmem_limit_bytes=VMEM_LIMIT),
    )(slopes.reshape(H, 1, 1).astype(jnp.float32), q, k, v)
    return out if S == S0 else out[:, :, :S0]


# -----------------------------------------------------------------------------
# Model config / params / forward
# -----------------------------------------------------------------------------
class Cfg:
    d_model = 32
    n_heads = 4
    n_layers = 2
    expansion_ratio = 4
    vocab_size = 128
    clip_qkv = 6.0
    qk_ln = True
    alibi_bias_max = 8
    no_bias = True  # MPT default: drops all linear & LayerNorm biases


def _get_alibi_slopes(total_num_heads, alibi_bias_max):
    next_power_of_2 = 2 ** math.ceil(math.log2(total_num_heads))
    m = jnp.arange(1, next_power_of_2 + 1, dtype=jnp.float32)
    m = m * (alibi_bias_max / next_power_of_2)
    slopes = 1.0 / jnp.power(2.0, m)
    if next_power_of_2 != total_num_heads:
        slopes = jnp.concatenate([slopes[1::2], slopes[::2]])[:total_num_heads]
    return slopes


def init_params(key, cfg):
    D = cfg.d_model
    I = cfg.expansion_ratio * D
    keys = jax.random.split(key, 1 + 4 * cfg.n_layers)
    # Weights stored in bf16 (MXU-native, half HBM traffic); LN gammas in f32.
    params = {
        "wte": (0.02 * jax.random.normal(keys[0], (cfg.vocab_size, D),
                                         jnp.float32)).astype(jnp.bfloat16),
        "norm_f_g": jnp.ones((D,), jnp.float32),
        "layers": [],
    }
    for l in range(cfg.n_layers):
        k0, k1, k2, k3 = keys[1 + 4 * l: 1 + 4 * (l + 1)]
        params["layers"].append({
            "ln1_g": jnp.ones((D,), jnp.float32),
            "wqkv": (0.02 * jax.random.normal(k0, (D, 3 * D),
                                              jnp.float32)).astype(jnp.bfloat16),
            "q_ln_g": jnp.ones((D,), jnp.float32),
            "k_ln_g": jnp.ones((D,), jnp.float32),
            "out_proj": (0.02 * jax.random.normal(k1, (D, D),
                                                  jnp.float32)).astype(jnp.bfloat16),
            "ln2_g": jnp.ones((D,), jnp.float32),
            "w_up": (0.02 * jax.random.normal(k2, (D, I),
                                              jnp.float32)).astype(jnp.bfloat16),
            "w_down": (0.02 * jax.random.normal(k3, (I, D),
                                                jnp.float32)).astype(jnp.bfloat16),
        })
    return params


def mpt_forward(params, cfg, input_ids, kv_caches=None):
    B, S = input_ids.shape
    D = cfg.d_model
    H = cfg.n_heads
    hd = D // H
    scale = hd ** -0.5
    slopes = _get_alibi_slopes(H, cfg.alibi_bias_max)

    T = B * S
    # wte gather (XLA); residual stream kept bf16 in HBM, f32 inside kernels.
    x = jnp.take(params["wte"], input_ids.reshape(-1), axis=0)   # (T, D) bf16

    def to_heads(t):
        return t.reshape(B, S, H, hd).transpose(0, 2, 1, 3)      # (B, H, S, hd)

    for lp in params["layers"]:
        # ---- attention sub-block: fused norm_1 + Wqkv + clip ----
        qkv = dense(x, lp["wqkv"], gamma=lp["ln1_g"], clip=cfg.clip_qkv,
                    out_dtype=jnp.bfloat16)
        q = qkv[:, :D]
        k = qkv[:, D:2 * D]
        v = qkv[:, 2 * D:]
        if cfg.qk_ln:
            q, k = qk_layer_norm(q, k, lp["q_ln_g"], lp["k_ln_g"])

        attn = flash_attention(to_heads(q), to_heads(k), to_heads(v),
                               slopes, scale)
        attn = attn.transpose(0, 2, 1, 3).reshape(T, D)

        # out_proj fused with residual add (f32 accumulation, bf16 store)
        x = dense(attn, lp["out_proj"], residual=x, out_dtype=jnp.bfloat16)

        # ---- MLP sub-block: fused norm_2 + up_proj + GELU + down_proj + residual ----
        x = mlp_block(x, lp["ln2_g"], lp["w_up"], lp["w_down"])

    x = layer_norm(x, params["norm_f_g"], out_dtype=jnp.float32)
    return x.reshape(B, S, D)


if __name__ == "__main__":
    cfg = Cfg()
    root = jax.random.PRNGKey(0)
    k_params, k_ids = jax.random.split(root)
    params = init_params(k_params, cfg)

    B, S = 2, 8
    input_ids = jax.random.randint(k_ids, (B, S), 0, cfg.vocab_size, dtype=jnp.int32)
    positions = jnp.broadcast_to(jnp.arange(S, dtype=jnp.int32), (B, S))  # unused (ALiBi)

    out = mpt_forward(params, cfg, input_ids)
    jax.block_until_ready(out)
    assert out.shape == (B, S, cfg.d_model)
    assert out.dtype == jnp.float32
    print("KERNEL_OK")
</pallas_src>

<mosaic_0001>
module attributes {stable_mosaic.version = 11 : i64} {
  func.func @_dense_kernel(%arg0: i32, %arg1: i32, %arg2: memref<16x32xbf16, #tpu.memory_space<vmem>>, %arg3: memref<1x32xf32, #tpu.memory_space<vmem>>, %arg4: memref<32x96xbf16, #tpu.memory_space<vmem>>, %arg5: memref<16x96xbf16, #tpu.memory_space<vmem>>) attributes {dimension_semantics = [#tpu.dimension_semantics<parallel>, #tpu.dimension_semantics<parallel>], iteration_bounds = array<i64: 1, 1>, scalar_prefetch = 0 : i64, scratch_operands = 0 : i64, tpu.core_type = #tpu.core_type<tc>, window_params = [{transform_indices = @transform_0, window_bounds = array<i64: 16, 32>}, {pipeline_mode = #tpu.pipeline_mode<synchronous>, transform_indices = @transform_1, window_bounds = array<i64: 1, 32>}, {transform_indices = @transform_2, window_bounds = array<i64: 32, 96>}, {transform_indices = @transform_3, window_bounds = array<i64: 16, 96>}]} {
    %c0 = arith.constant 0 : index
    %c0_0 = arith.constant 0 : index
    %0 = vector.load %arg2[%c0, %c0_0] : memref<16x32xbf16, #tpu.memory_space<vmem>>, vector<16x32xbf16>
    %1 = arith.extf %0 : vector<16x32xbf16> to vector<16x32xf32>
    %c0_1 = arith.constant 0 : index
    %c0_2 = arith.constant 0 : index
    %2 = vector.load %arg3[%c0_1, %c0_2] : memref<1x32xf32, #tpu.memory_space<vmem>>, vector<1x32xf32>
    %cst = arith.constant dense<0.000000e+00> : vector<16xf32>
    %3 = vector.multi_reduction <add>, %1, %cst [1] : vector<16x32xf32> to vector<16xf32>
    %4 = vector.shape_cast %3 : vector<16xf32> to vector<16x1xf32>
    %cst_3 = arith.constant 3.200000e+01 : f32
    %5 = vector.broadcast %cst_3 : f32 to vector<16x1xf32>
    %6 = arith.divf %4, %5 : vector<16x1xf32>
    %7 = vector.broadcast %6 : vector<16x1xf32> to vector<16x32xf32>
    %8 = arith.subf %1, %7 : vector<16x32xf32>
    %9 = arith.mulf %8, %8 : vector<16x32xf32>
    %cst_4 = arith.constant dense<0.000000e+00> : vector<16xf32>
    %10 = vector.multi_reduction <add>, %9, %cst_4 [1] : vector<16x32xf32> to vector<16xf32>
    %11 = vector.shape_cast %10 : vector<16xf32> to vector<16x1xf32>
    %cst_5 = arith.constant 3.200000e+01 : f32
    %12 = vector.broadcast %cst_5 : f32 to vector<16x1xf32>
    %13 = arith.divf %11, %12 : vector<16x1xf32>
    %cst_6 = arith.constant 9.99999974E-6 : f32
    %14 = vector.broadcast %cst_6 : f32 to vector<16x1xf32>
    %15 = arith.addf %13, %14 : vector<16x1xf32>
    %16 = math.rsqrt %15 : vector<16x1xf32>
    %17 = vector.broadcast %16 : vector<16x1xf32> to vector<16x32xf32>
    %18 = arith.mulf %8, %17 : vector<16x32xf32>
    %19 = vector.broadcast %2 : vector<1x32xf32> to vector<16x32xf32>
    %20 = arith.mulf %18, %19 : vector<16x32xf32>
    %21 = arith.truncf %20 : vector<16x32xf32> to vector<16x32xbf16>
    %c0_7 = arith.constant 0 : index
    %c0_8 = arith.constant 0 : index
    %22 = vector.load %arg4[%c0_7, %c0_8] : memref<32x96xbf16, #tpu.memory_space<vmem>>, vector<32x96xbf16>
    %cst_9 = arith.constant dense<0.000000e+00> : vector<16x96xf32>
    %23 = tpu.matmul %21, %22, %cst_9 {dimension_numbers = #tpu.dot_dimension_numbers<[1], [0], [0], [1], [0, 0, 1, 1], [], []>} : vector<16x32xbf16>, vector<32x96xbf16>, vector<16x96xf32> -> vector<16x96xf32>
    %cst_10 = arith.constant -6.000000e+00 : f32
    %cst_11 = arith.constant 6.000000e+00 : f32
    %24 = vector.broadcast %cst_10 : f32 to vector<16x96xf32>
    %25 = arith.maximumf %24, %23 : vector<16x96xf32>
    %26 = vector.broadcast %cst_11 : f32 to vector<16x96xf32>
    %27 = arith.minimumf %26, %25 : vector<16x96xf32>
    %28 = arith.truncf %27 : vector<16x96xf32> to vector<16x96xbf16>
    %c0_12 = arith.constant 0 : index
    %c0_13 = arith.constant 0 : index
    %29 = vector.load %arg5[%c0_12, %c0_13] : memref<16x96xbf16, #tpu.memory_space<vmem>>, vector<16x96xbf16>
    tpu.vector_store %arg5[%c0_12, %c0_13], %28 {strides = array<i32>} : memref<16x96xbf16, #tpu.memory_space<vmem>>, vector<16x96xbf16>,
    return
  }
  func.func @transform_0(%arg0: i32, %arg1: i32) -> (i32, i32) {
    %c0_i32 = arith.constant 0 : i32
    %c0_i32_0 = arith.constant 0 : i32
    return %arg0, %c0_i32 : i32, i32
  }
  func.func @transform_1(%arg0: i32, %arg1: i32) -> (i32, i32) {
    %c0_i32 = arith.constant 0 : i32
    %c0_i32_0 = arith.constant 0 : i32
    %c0_i32_1 = arith.constant 0 : i32
    return %c0_i32, %c0_i32_0 : i32, i32
  }
  func.func @transform_2(%arg0: i32, %arg1: i32) -> (i32, i32) {
    %c0_i32 = arith.constant 0 : i32
    %c0_i32_0 = arith.constant 0 : i32
    return %c0_i32, %arg1 : i32, i32
  }
  func.func @transform_3(%arg0: i32, %arg1: i32) -> (i32, i32) {
    %c0_i32 = arith.constant 0 : i32
    return %arg0, %arg1 : i32, i32
  }
}

</mosaic_0001>

<llo_original>
// kernel: tpu_custom_call.1
$region0: #{tpu_custom_call.1}
  #allocation0 [shape = 'u32[]', space=smem, size = 0x4, offset = 0x4, fixed_abs, tag = 'smem constant byte address 0x4 - core index']
  #allocation1 [shape = 'u32[144,128]{1,0:T(1,128)}', space=vmem, size = 0x12000, scoped, tag = 'internal scratch']
  %s0 = inlined_call_operand.hbm [shape: bf16[16,32], index: 0, kind: input, shape index: {}]
  %s1 = inlined_call_operand.vmem [shape: f32[1,32], index: 1, kind: input, shape index: {}]
  %s2 = inlined_call_operand.hbm [shape: bf16[32,96], index: 2, kind: input, shape index: {}]
  %s3 = inlined_call_operand.hbm [shape: bf16[16,96], index: 3, kind: output, shape index: {}]
  %s4 = sld [smem:[#allocation0]]
  $region30: #{tpu_custom_call.1} parent=0
    _
  %s6 = ssub.s32 1, %s4
  %s7 = scalar_select 0, %s6, %s4
  $region1: #{tpu_custom_call.1} parent=0
    #allocation2 [shape = 'u8[4096]{0}', space=vmem, size = 0x1000, scoped, tag = 'input window, operand 0, single buffered']
    #allocation3 [shape = 's32[1]{0}', space=sflag, size = 0x4, scoped, tag = 'scoped memory for tpu_custom_call.1']
    #allocation4 [shape = 's32[1]{0}', space=sflag, size = 0x4, scoped, tag = 'scoped memory for tpu_custom_call.1']
    #allocation5 [shape = 'u8[8192]{0}', space=vmem, size = 0x2000, scoped, tag = 'input window, operand 2, single buffered']
    #allocation6 [shape = 's32[1]{0}', space=sflag, size = 0x4, scoped, tag = 'scoped memory for tpu_custom_call.1']
    #allocation7 [shape = 'u8[4096]{0}', space=vmem, size = 0x1000, scoped, tag = 'output window, operand 0, single buffered']
    %8 = vsyncpa [#allocation3], 0
    %9 = vsyncpa [#allocation6], 0
    %10 = vsyncpa [#allocation4], 0
    // Predicated region
    $region2: #{tpu_custom_call.1} parent=1 // pred_check
      _
    $region3: #{tpu_custom_call.1} parent=1 // pred_check_branch
      %12 = sbr.rel (0) target = $region5
    $region4: #{tpu_custom_call.1} parent=1 // pred_region
      %s14 = ssub.s32 128, 128
      %15 = vsyncadd [#allocation3], %s14
      %s16 = sshll.u32 [#allocation2], 4
      %s17 = int_to_ptr.vmem [resolvable:$true] %s16
      %22 = dma.hbm_to_vmem [thread:$0]  %s0, 128, %s17, [#allocation3], 64, 64, 4
    $region5: #{tpu_custom_call.1} parent=1 // pred_fallthru
      _
    // Predicated region
    $region6: #{tpu_custom_call.1} parent=1 // pred_check
      _
    $region7: #{tpu_custom_call.1} parent=1 // pred_check_branch
      %24 = sbr.rel (0) target = $region9
    $region8: #{tpu_custom_call.1} parent=1 // pred_region
      _
    $region9: #{tpu_custom_call.1} parent=1 // pred_fallthru
      _
    // Predicated region
    $region10: #{tpu_custom_call.1} parent=1 // pred_check
      _
    $region11: #{tpu_custom_call.1} parent=1 // pred_check_branch
      %26 = sbr.rel (0) target = $region13
    $region12: #{tpu_custom_call.1} parent=1 // pred_region
      %s28 = ssub.s32 256, 256
      %29 = vsyncadd [#allocation6], %s28
      %s30 = sshll.u32 [#allocation5], 4
      %s31 = int_to_ptr.vmem [resolvable:$true] %s30
      %36 = dma.hbm_to_vmem [thread:$0]  %s2, 256, %s31, [#allocation6], 64, 64, 4
    $region13: #{tpu_custom_call.1} parent=1 // pred_fallthru
      _
    // Predicated region
    $region14: #{tpu_custom_call.1} parent=1 // pred_check
      _
    $region15: #{tpu_custom_call.1} parent=1 // pred_check_branch
      %38 = sbr.rel (0) target = $region17
    $region16: #{tpu_custom_call.1} parent=1 // pred_region
      %39 = dma.done [#allocation3], 128
    $region17: #{tpu_custom_call.1} parent=1 // pred_fallthru
      _
    // Predicated region
    $region18: #{tpu_custom_call.1} parent=1 // pred_check
      _
    $region19: #{tpu_custom_call.1} parent=1 // pred_check_branch
      %41 = sbr.rel (0) target = $region21
    $region20: #{tpu_custom_call.1} parent=1 // pred_region
      %42 = dma.done [#allocation6], 256
    $region21: #{tpu_custom_call.1} parent=1 // pred_fallthru
      _
    %v44 = vld [vmem:[#allocation2] sm:$0xf]
    %v45 = vld [vmem:[#allocation2 + $0x4] sm:$0xf]
    %v46 = vunpack.c.l.bf16 %v44
    %v47 = vunpack.c.l.bf16 %v45
    %v48 = vld [vmem:[%s1] sm:$0x1]
    %vm49 = vcmask 261120
    %v50 = vsel %vm49, %v46, 0.0
    %51 = vadd.xlane.f32.xlu0 %v50
    %v52 = vpop.xlane.xlu0 %51
    %v53 = vsel %vm49, %v47, 0.0
    %54 = vadd.xlane.f32.xlu0 %v53
    %v55 = vpop.xlane.xlu0 %54
    %v56 = vrcp.pop 32.0
    %v57 = vmul.f32 %v52, %v56
    %v58 = vmul.f32 %v55, %v56
    %v59 = vsub.f32 %v46, %v57
    %v60 = vsub.f32 %v47, %v58
    %v61 = vmul.f32 %v59, %v59
    %v62 = vmul.f32 %v60, %v60
    %v63 = vsel %vm49, %v61, 0.0
    %64 = vadd.xlane.f32.xlu0 %v63
    %v65 = vpop.xlane.xlu0 %64
    %v66 = vsel %vm49, %v62, 0.0
    %67 = vadd.xlane.f32.xlu0 %v66
    %v68 = vpop.xlane.xlu0 %67
    %v69 = vmul.f32 %v65, %v56
    %v70 = vmul.f32 %v68, %v56
    %v71 = vadd.f32 %v69, 1e-05
    %v72 = vadd.f32 %v70, 1e-05
    %v73 = vrsqrt.pop %v71
    %v74 = vrsqrt.pop %v72
    %v75 = vmul.f32 %v59, %v73
    %v76 = vmul.f32 %v60, %v74
    %v78 = vlaneseq
    %v79 = vshrl.u32 %v78, 7
    %v80 = vsub.s32 0, %v79
    %v81 = vrot.slane %v48, %v80
    %v83 = vmul.f32 %v75, %v81
    %v84 = vmul.f32 %v76, %v81
    %v85 = vpack.c.bf16 %v84, %v83
    %v86 = vld [vmem:[#allocation5] sm:$0xf]
    %v87 = vld [vmem:[#allocation5 + $0x4] sm:$0xf]
    %v88 = vld [vmem:[#allocation5 + $0x8] sm:$0xf]
    %v89 = vld [vmem:[#allocation5 + $0xc] sm:$0xf]
    %v94 = vunpack.c.l.b16 %v86
    %v95 = vunpack.c.l.b16 %v87
    %v96 = vunpack.c.l.b16 %v88
    %v97 = vunpack.c.l.b16 %v89
    %v98 = vpack.c.b16 %v95, %v94
    %v99 = vpack.c.b16 %v97, %v96
    %v103 = vsel %vm49, %v85, 0
    %105 = vmatprep.subr.bf16.mxu0 0
    %106 = vmatpush1.bf16.msra.mxu0 %v98
    %107 = vmatprep.subr.bf16.mxu0 0
    %108 = vmatpush1.bf16.msra.mxu0 %v99
    %109 = vmatprep.subr.bf16.mxu0 0
    %110 = vmatpush1.bf16.msra.mxu0 0
    %111 = vmatprep.subr.bf16.mxu0 0
    %112 = vmatpush1.bf16.msra.mxu0 0
    %113 = vmatprep.subr.bf16.mxu0 0
    %114 = vmatpush1.bf16.msra.mxu0 0
    %115 = vmatprep.subr.bf16.mxu0 0
    %116 = vmatpush1.bf16.msra.mxu0 0
    %117 = vmatprep.subr.bf16.mxu0 0
    %118 = vmatpush1.bf16.msra.mxu0 0
    %119 = vmatprep.subr.bf16.mxu0 0
    %120 = vmatpush1.bf16.msra.mxu0 0
    %121 = vmatprep.subr.bf16.mxu0 0
    %122 = vmatpush1.bf16.msra.mxu0 0
    %123 = vmatprep.subr.bf16.mxu0 0
    %124 = vmatpush1.bf16.msra.mxu0 0
    %125 = vmatprep.subr.bf16.mxu0 0
    %126 = vmatpush1.bf16.msra.mxu0 0
    %127 = vmatprep.subr.bf16.mxu0 0
    %128 = vmatpush1.bf16.msra.mxu0 0
    %129 = vmatprep.subr.bf16.mxu0 0
    %130 = vmatpush1.bf16.msra.mxu0 0
    %131 = vmatprep.subr.bf16.mxu0 0
    %132 = vmatpush1.bf16.msra.mxu0 0
    %133 = vmatprep.subr.bf16.mxu0 0
    %134 = vmatpush1.bf16.msra.mxu0 0
    %135 = vmatprep.subr.bf16.mxu0 0
    %136 = vmatpush1.bf16.msra.mxu0 0
    %137 = vmatprep.mubr.bf16.mxu0 0
    %138 = vmatmul.mubr.bf16.gmra.mrb[0].mxu0 %v103
    %v139 = vpop.f32.mrb[0].mxu0
    %v140 = vadd.f32 0.0, %v139
    %v141 = vpop.f32.mrb[0].mxu0
    %v142 = vpop.f32.mrb[0].mxu0
    %v143 = vadd.f32 0.0, %v142
    %v144 = vpop.f32.mrb[0].mxu0
    %145 = vdwg.mxu0
    %v146 = vmax.f32 %v140, -6.0
    %v147 = vmax.f32 %v143, -6.0
    %v148 = vmin.f32 %v146, 6.0
    %v149 = vmin.f32 %v147, 6.0
    %v150 = vpack.c.bf16 %v149, %v148
    %v152 = vunpack.c.l.b16 %v150
    %v153 = vunpack.c.h.b16 %v150
    %v154 = vpack.c.b16 %v152, %v152
    %v155 = vpack.c.b16 %v153, %v153
    %vm158 = vcmask 781312
    %159 = vst.msk [vmem:[#allocation7] sm:$0xf] %vm158, %v154
    %160 = vst.msk [vmem:[#allocation7 + $0x4] sm:$0xf] %vm158, %v155
    // Predicated region
    $region22: #{tpu_custom_call.1} parent=1 // pred_check
      _
    $region23: #{tpu_custom_call.1} parent=1 // pred_check_branch
      %162 = sbr.rel (0) target = $region25
    $region24: #{tpu_custom_call.1} parent=1 // pred_region
      %s164 = ssub.s32 128, 128
      %165 = vsyncadd [#allocation4], %s164
      %s166 = sshll.u32 [#allocation7], 4
      %s167 = int_to_ptr.vmem [resolvable:$true] %s166
      %172 = dma.vmem_to_hbm [thread:$0]  %s167, 128, %s3, [#allocation4], 64, 64, 4
    $region25: #{tpu_custom_call.1} parent=1 // pred_fallthru
      _
    // Predicated region
    $region26: #{tpu_custom_call.1} parent=1 // pred_check
      _
    $region27: #{tpu_custom_call.1} parent=1 // pred_check_branch
      %174 = sbr.rel (0) target = $region29
    $region28: #{tpu_custom_call.1} parent=1 // pred_region
      %175 = dma.done [#allocation4], 128
    $region29: #{tpu_custom_call.1} parent=1 // pred_fallthru
      _
    %176 = vsyncpa [#allocation3], 1
    %177 = vsyncpa [#allocation6], 1
    %178 = vsyncpa [#allocation4], 1

</llo_original>
